<compile_context>
chip_gen: v6e
topology: v6e:2x2x1
jax: 0.10.0
libtpu: 0.0.40
codegen_flags: <defaults>
</compile_context>

<pallas_src>
import functools

import jax
import jax.numpy as jnp
from jax.experimental import pallas as pl
from jax.experimental.pallas import tpu as pltpu

HIDDEN = 64
# tb=4096 per-step VMEM (f32): x^T 16*tb*4 = 256 KiB, out^T 8*tb*4 = 128 KiB
# (both double-buffered) + h1/h2 2*64*tb*4 = 2 MiB  ->  << 32 MiB scoped default
# on v5e/v6e/v7x.  Re-sweep 2048-8192 with an xprof trace per generation.
DEFAULT_TILE_B = 4096


def _dqn_kernel(xt_ref, w1_ref, b1_ref, w2_ref, b2_ref, w3_ref, b3_ref, ot_ref):
    """One batch tile, feature-major: batch lives on the lane axis everywhere,
    three MXU matmuls with f32 accumulation, bias-add + ReLU on the VPU."""
    xt = xt_ref[...]                                                  # (state, tb)

    # fc1 + ReLU : (64, state) @ (state, tb) -> (64, tb)
    h1 = jnp.dot(w1_ref[...], xt, preferred_element_type=jnp.float32) + b1_ref[...]
    h1 = jnp.maximum(h1, 0.0)

    # fc2 + ReLU : (64, 64) @ (64, tb) -> (64, tb)
    h2 = jnp.dot(w2_ref[...], h1, preferred_element_type=jnp.float32) + b2_ref[...]
    h2 = jnp.maximum(h2, 0.0)

    # fc3 (no activation) : (action, 64) @ (64, tb) -> (action, tb)
    out = jnp.dot(w3_ref[...], h2, preferred_element_type=jnp.float32) + b3_ref[...]
    ot_ref[...] = out.astype(ot_ref.dtype)


def _pick_tile(batch: int, tile_b: int) -> int:
    """Batch tile size (lane dim of every block).

    Small batch: one full-extent block (block dim == full array dim is exempt
    from the 128-lane divisibility rule).  Large batch: multiples of 128,
    capped both at tile_b (per-step-overhead / VMEM sweet spot) and at
    ceil(batch/2) so the grid keeps >= 2 steps and the parallel batch axis can
    shard across v7x's two TensorCores."""
    if batch < 256:
        return batch
    half = pl.cdiv(batch, 2)
    half_rounded = pl.cdiv(half, 128) * 128
    return min(tile_b, half_rounded)


@functools.partial(jax.jit, static_argnames=("tile_b",))
def dq_network_forward(x, params, tile_b=DEFAULT_TILE_B):
    """x: (batch, state_size) float32.
    params: f32, PyTorch-native layout: w* is (out_features, in_features),
    b* is (out_features, 1)."""
    w1, b1 = params["w1"], params["b1"]
    w2, b2 = params["w2"], params["b2"]
    w3, b3 = params["w3"], params["b3"]

    batch, state_size = x.shape
    action_size = w3.shape[0]

    tb = _pick_tile(batch, tile_b)
    grid = (pl.cdiv(batch, tb),)

    # Batch-on-lanes: layout plumbing only (negligible vs. kernel HBM traffic).
    xt = x.T                                                          # (state, batch)

    flops = 2 * batch * (state_size * HIDDEN + HIDDEN * HIDDEN + HIDDEN * action_size)
    bytes_accessed = (
        x.size * x.dtype.itemsize
        + sum(p.size * p.dtype.itemsize for p in (w1, b1, w2, b2, w3, b3))
        + batch * action_size * 4
    )

    out_t = pl.pallas_call(
        _dqn_kernel,
        out_shape=jax.ShapeDtypeStruct((action_size, batch), jnp.float32),
        grid=grid,
        in_specs=[
            pl.BlockSpec((state_size, tb), lambda i: (0, i)),        # x^T: batch tiled on lanes
            pl.BlockSpec((HIDDEN, state_size), lambda i: (0, 0)),    # w1 resident
            pl.BlockSpec((HIDDEN, 1), lambda i: (0, 0)),             # b1 resident
            pl.BlockSpec((HIDDEN, HIDDEN), lambda i: (0, 0)),        # w2 resident
            pl.BlockSpec((HIDDEN, 1), lambda i: (0, 0)),             # b2 resident
            pl.BlockSpec((action_size, HIDDEN), lambda i: (0, 0)),   # w3 resident
            pl.BlockSpec((action_size, 1), lambda i: (0, 0)),        # b3 resident
        ],
        out_specs=pl.BlockSpec((action_size, tb), lambda i: (0, i)),
        compiler_params=pltpu.CompilerParams(
            # Batch tiles are independent -> shard across v7x's two TensorCores
            # (harmless no-op on 1-TC v5e/v6e).
            # TODO(synk): sweep pltpu.CORE_PARALLEL on v7x as an alternative.
            dimension_semantics=("parallel",),
        ),
        cost_estimate=pl.CostEstimate(
            flops=flops, transcendentals=0, bytes_accessed=bytes_accessed
        ),
    )(xt, w1, b1, w2, b2, w3, b3)

    return out_t.T                                                    # (batch, action)


def init_dqn_params(key, state_size, action_size, hidden=HIDDEN):
    """PyTorch nn.Linear-style init: U(-1/sqrt(fan_in), 1/sqrt(fan_in)).
    Weights kept f32 in PyTorch-native (out_features, in_features) layout;
    biases stored as (out_features, 1) columns (broadcast against (out, tb))."""
    keys = jax.random.split(key, 6)

    def layer(kw, kb, fan_in, fan_out):
        bound = 1.0 / jnp.sqrt(jnp.float32(fan_in))
        w = jax.random.uniform(kw, (fan_out, fan_in), jnp.float32, -bound, bound)
        b = jax.random.uniform(kb, (fan_out, 1), jnp.float32, -bound, bound)
        return w, b

    w1, b1 = layer(keys[0], keys[1], state_size, hidden)
    w2, b2 = layer(keys[2], keys[3], hidden, hidden)
    w3, b3 = layer(keys[4], keys[5], hidden, action_size)
    return {"w1": w1, "b1": b1, "w2": w2, "b2": b2, "w3": w3, "b3": b3}


def _reference_forward(x, params):
    """Pure-JAX f32 reference (PyTorch forward semantics)."""
    h1 = jnp.maximum(x @ params["w1"].T + params["b1"].T, 0.0)
    h2 = jnp.maximum(h1 @ params["w2"].T + params["b2"].T, 0.0)
    return h2 @ params["w3"].T + params["b3"].T


if __name__ == "__main__":
    key = jax.random.PRNGKey(0)
    k_param, k_x_small, k_x_big = jax.random.split(key, 3)

    state_size = 16
    action_size = 8
    params = init_dqn_params(k_param, state_size, action_size, hidden=HIDDEN)

    # Small batch (single full-extent block).
    batch = 2
    x = jax.random.normal(k_x_small, (batch, state_size), dtype=jnp.float32)
    out = jax.block_until_ready(dq_network_forward(x, params))
    ref = _reference_forward(x, params)
    assert out.shape == (batch, action_size), out.shape
    assert jnp.allclose(out, ref, atol=1e-2, rtol=1e-2), "mismatch (small batch)"

    # Larger batch: exercises the multi-step (>=2) tiled grid / megacore path.
    big_batch = 512
    xb = jax.random.normal(k_x_big, (big_batch, state_size), dtype=jnp.float32)
    outb = jax.block_until_ready(dq_network_forward(xb, params))
    refb = _reference_forward(xb, params)
    assert outb.shape == (big_batch, action_size), outb.shape
    assert jnp.allclose(outb, refb, atol=1e-2, rtol=1e-2), "mismatch (big batch)"

    print("KERNEL_OK")
</pallas_src>

<mosaic_0001>
module attributes {stable_mosaic.version = 11 : i64} {
  func.func @_dqn_kernel(%arg0: i32, %arg1: memref<16x2xf32, #tpu.memory_space<vmem>>, %arg2: memref<64x16xf32, #tpu.memory_space<vmem>>, %arg3: memref<64x1xf32, #tpu.memory_space<vmem>>, %arg4: memref<64x64xf32, #tpu.memory_space<vmem>>, %arg5: memref<64x1xf32, #tpu.memory_space<vmem>>, %arg6: memref<8x64xf32, #tpu.memory_space<vmem>>, %arg7: memref<8x1xf32, #tpu.memory_space<vmem>>, %arg8: memref<8x2xf32, #tpu.memory_space<vmem>>) attributes {dimension_semantics = [#tpu.dimension_semantics<parallel>], iteration_bounds = array<i64: 1>, scalar_prefetch = 0 : i64, scratch_operands = 0 : i64, tpu.core_type = #tpu.core_type<tc>, window_params = [{transform_indices = @transform_0, window_bounds = array<i64: 16, 2>}, {pipeline_mode = #tpu.pipeline_mode<synchronous>, transform_indices = @transform_1, window_bounds = array<i64: 64, 16>}, {pipeline_mode = #tpu.pipeline_mode<synchronous>, transform_indices = @transform_2, window_bounds = array<i64: 64, 1>}, {pipeline_mode = #tpu.pipeline_mode<synchronous>, transform_indices = @transform_3, window_bounds = array<i64: 64, 64>}, {pipeline_mode = #tpu.pipeline_mode<synchronous>, transform_indices = @transform_4, window_bounds = array<i64: 64, 1>}, {pipeline_mode = #tpu.pipeline_mode<synchronous>, transform_indices = @transform_5, window_bounds = array<i64: 8, 64>}, {pipeline_mode = #tpu.pipeline_mode<synchronous>, transform_indices = @transform_6, window_bounds = array<i64: 8, 1>}, {transform_indices = @transform_7, window_bounds = array<i64: 8, 2>}]} {
    %c0 = arith.constant 0 : index
    %c0_0 = arith.constant 0 : index
    %0 = vector.load %arg1[%c0, %c0_0] : memref<16x2xf32, #tpu.memory_space<vmem>>, vector<16x2xf32>
    %c0_1 = arith.constant 0 : index
    %c0_2 = arith.constant 0 : index
    %1 = vector.load %arg2[%c0_1, %c0_2] : memref<64x16xf32, #tpu.memory_space<vmem>>, vector<64x16xf32>
    %cst = arith.constant dense<0.000000e+00> : vector<64x2xf32>
    %2 = tpu.matmul %1, %0, %cst {dimension_numbers = #tpu.dot_dimension_numbers<[1], [0], [0], [1], [0, 0, 1, 1], [], []>} : vector<64x16xf32>, vector<16x2xf32>, vector<64x2xf32> -> vector<64x2xf32>
    %c0_3 = arith.constant 0 : index
    %c0_4 = arith.constant 0 : index
    %3 = vector.load %arg3[%c0_3, %c0_4] : memref<64x1xf32, #tpu.memory_space<vmem>>, vector<64x1xf32>
    %4 = vector.broadcast %3 : vector<64x1xf32> to vector<64x2xf32>
    %5 = arith.addf %2, %4 : vector<64x2xf32>
    %cst_5 = arith.constant 0.000000e+00 : f32
    %6 = vector.broadcast %cst_5 : f32 to vector<64x2xf32>
    %7 = arith.maximumf %5, %6 : vector<64x2xf32>
    %c0_6 = arith.constant 0 : index
    %c0_7 = arith.constant 0 : index
    %8 = vector.load %arg4[%c0_6, %c0_7] : memref<64x64xf32, #tpu.memory_space<vmem>>, vector<64x64xf32>
    %cst_8 = arith.constant dense<0.000000e+00> : vector<64x2xf32>
    %9 = tpu.matmul %8, %7, %cst_8 {dimension_numbers = #tpu.dot_dimension_numbers<[1], [0], [0], [1], [0, 0, 1, 1], [], []>} : vector<64x64xf32>, vector<64x2xf32>, vector<64x2xf32> -> vector<64x2xf32>
    %c0_9 = arith.constant 0 : index
    %c0_10 = arith.constant 0 : index
    %10 = vector.load %arg5[%c0_9, %c0_10] : memref<64x1xf32, #tpu.memory_space<vmem>>, vector<64x1xf32>
    %11 = vector.broadcast %10 : vector<64x1xf32> to vector<64x2xf32>
    %12 = arith.addf %9, %11 : vector<64x2xf32>
    %cst_11 = arith.constant 0.000000e+00 : f32
    %13 = vector.broadcast %cst_11 : f32 to vector<64x2xf32>
    %14 = arith.maximumf %12, %13 : vector<64x2xf32>
    %c0_12 = arith.constant 0 : index
    %c0_13 = arith.constant 0 : index
    %15 = vector.load %arg6[%c0_12, %c0_13] : memref<8x64xf32, #tpu.memory_space<vmem>>, vector<8x64xf32>
    %cst_14 = arith.constant dense<0.000000e+00> : vector<8x2xf32>
    %16 = tpu.matmul %15, %14, %cst_14 {dimension_numbers = #tpu.dot_dimension_numbers<[1], [0], [0], [1], [0, 0, 1, 1], [], []>} : vector<8x64xf32>, vector<64x2xf32>, vector<8x2xf32> -> vector<8x2xf32>
    %c0_15 = arith.constant 0 : index
    %c0_16 = arith.constant 0 : index
    %17 = vector.load %arg7[%c0_15, %c0_16] : memref<8x1xf32, #tpu.memory_space<vmem>>, vector<8x1xf32>
    %18 = vector.broadcast %17 : vector<8x1xf32> to vector<8x2xf32>
    %19 = arith.addf %16, %18 : vector<8x2xf32>
    %c0_17 = arith.constant 0 : index
    %c0_18 = arith.constant 0 : index
    %20 = vector.load %arg8[%c0_17, %c0_18] : memref<8x2xf32, #tpu.memory_space<vmem>>, vector<8x2xf32>
    tpu.vector_store %arg8[%c0_17, %c0_18], %19 {strides = array<i32>} : memref<8x2xf32, #tpu.memory_space<vmem>>, vector<8x2xf32>,
    return
  }
  func.func @transform_0(%arg0: i32) -> (i32, i32) {
    %c0_i32 = arith.constant 0 : i32
    %c0_i32_0 = arith.constant 0 : i32
    return %c0_i32, %arg0 : i32, i32
  }
  func.func @transform_1(%arg0: i32) -> (i32, i32) {
    %c0_i32 = arith.constant 0 : i32
    %c0_i32_0 = arith.constant 0 : i32
    %c0_i32_1 = arith.constant 0 : i32
    return %c0_i32, %c0_i32_0 : i32, i32
  }
  func.func @transform_2(%arg0: i32) -> (i32, i32) {
    %c0_i32 = arith.constant 0 : i32
    %c0_i32_0 = arith.constant 0 : i32
    %c0_i32_1 = arith.constant 0 : i32
    return %c0_i32, %c0_i32_0 : i32, i32
  }
  func.func @transform_3(%arg0: i32) -> (i32, i32) {
    %c0_i32 = arith.constant 0 : i32
    %c0_i32_0 = arith.constant 0 : i32
    %c0_i32_1 = arith.constant 0 : i32
    return %c0_i32, %c0_i32_0 : i32, i32
  }
  func.func @transform_4(%arg0: i32) -> (i32, i32) {
    %c0_i32 = arith.constant 0 : i32
    %c0_i32_0 = arith.constant 0 : i32
    %c0_i32_1 = arith.constant 0 : i32
    return %c0_i32, %c0_i32_0 : i32, i32
  }
  func.func @transform_5(%arg0: i32) -> (i32, i32) {
    %c0_i32 = arith.constant 0 : i32
    %c0_i32_0 = arith.constant 0 : i32
    %c0_i32_1 = arith.constant 0 : i32
    return %c0_i32, %c0_i32_0 : i32, i32
  }
  func.func @transform_6(%arg0: i32) -> (i32, i32) {
    %c0_i32 = arith.constant 0 : i32
    %c0_i32_0 = arith.constant 0 : i32
    %c0_i32_1 = arith.constant 0 : i32
    return %c0_i32, %c0_i32_0 : i32, i32
  }
  func.func @transform_7(%arg0: i32) -> (i32, i32) {
    %c0_i32 = arith.constant 0 : i32
    %c0_i32_0 = arith.constant 0 : i32
    return %c0_i32, %arg0 : i32, i32
  }
}

</mosaic_0001>

<llo_original>
// kernel: dq_network_forward.1
$region0: #{dq_network_forward.1}
  #allocation0 [shape = 'u32[]', space=smem, size = 0x4, offset = 0x4, fixed_abs, tag = 'smem constant byte address 0x4 - core index']
  #allocation1 [shape = 'u32[144,128]{1,0:T(1,128)}', space=vmem, size = 0x12000, scoped, tag = 'internal scratch']
  %s0 = inlined_call_operand.vmem [shape: f32[16,2], index: 0, kind: input, shape index: {}]
  %s1 = inlined_call_operand.vmem [shape: f32[64,16], index: 1, kind: input, shape index: {}]
  %s2 = inlined_call_operand.vmem [shape: f32[64,1], index: 2, kind: input, shape index: {}]
  %s3 = inlined_call_operand.vmem [shape: f32[64,64], index: 3, kind: input, shape index: {}]
  %s4 = inlined_call_operand.vmem [shape: f32[64,1], index: 4, kind: input, shape index: {}]
  %s5 = inlined_call_operand.vmem [shape: f32[8,64], index: 5, kind: input, shape index: {}]
  %s6 = inlined_call_operand.vmem [shape: f32[8,1], index: 6, kind: input, shape index: {}]
  %s7 = inlined_call_operand.vmem [shape: f32[8,2], index: 7, kind: output, shape index: {}]
  %s8 = sld [smem:[#allocation0]]
  $region38: #{dq_network_forward.1} parent=0
    _
  %s10 = ssub.s32 1, %s8
  %s11 = scalar_select 0, %s10, %s8
  // Predicated region
  $region2: #{dq_network_forward.1} parent=0 // pred_check
    _
  $region3: #{dq_network_forward.1} parent=0 // pred_check_branch
    %13 = sbr.rel (0) target = $region5
  $region4: #{dq_network_forward.1} parent=0 // pred_region
    _
  $region5: #{dq_network_forward.1} parent=0 // pred_fallthru
    _
  // Predicated region
  $region6: #{dq_network_forward.1} parent=0 // pred_check
    _
  $region7: #{dq_network_forward.1} parent=0 // pred_check_branch
    %15 = sbr.rel (0) target = $region9
  $region8: #{dq_network_forward.1} parent=0 // pred_region
    _
  $region9: #{dq_network_forward.1} parent=0 // pred_fallthru
    _
  // Predicated region
  $region10: #{dq_network_forward.1} parent=0 // pred_check
    _
  $region11: #{dq_network_forward.1} parent=0 // pred_check_branch
    %17 = sbr.rel (0) target = $region13
  $region12: #{dq_network_forward.1} parent=0 // pred_region
    _
  $region13: #{dq_network_forward.1} parent=0 // pred_fallthru
    _
  // Predicated region
  $region14: #{dq_network_forward.1} parent=0 // pred_check
    _
  $region15: #{dq_network_forward.1} parent=0 // pred_check_branch
    %19 = sbr.rel (0) target = $region17
  $region16: #{dq_network_forward.1} parent=0 // pred_region
    _
  $region17: #{dq_network_forward.1} parent=0 // pred_fallthru
    _
  // Predicated region
  $region18: #{dq_network_forward.1} parent=0 // pred_check
    _
  $region19: #{dq_network_forward.1} parent=0 // pred_check_branch
    %21 = sbr.rel (0) target = $region21
  $region20: #{dq_network_forward.1} parent=0 // pred_region
    _
  $region21: #{dq_network_forward.1} parent=0 // pred_fallthru
    _
  // Predicated region
  $region22: #{dq_network_forward.1} parent=0 // pred_check
    _
  $region23: #{dq_network_forward.1} parent=0 // pred_check_branch
    %23 = sbr.rel (0) target = $region25
  $region24: #{dq_network_forward.1} parent=0 // pred_region
    _
  $region25: #{dq_network_forward.1} parent=0 // pred_fallthru
    _
  // Predicated region
  $region26: #{dq_network_forward.1} parent=0 // pred_check
    _
  $region27: #{dq_network_forward.1} parent=0 // pred_check_branch
    %25 = sbr.rel (0) target = $region29
  $region28: #{dq_network_forward.1} parent=0 // pred_region
    _
  $region29: #{dq_network_forward.1} parent=0 // pred_fallthru
    _
  %v26 = vld [vmem:[%s0] sm:$0xff]
  %v27 = vld [vmem:[%s0 + $0x8] sm:$0xff]
  %v28 = vld [vmem:[%s1] sm:$0xff]
  %v29 = vld [vmem:[%s1 + $0x8] sm:$0xff]
  %v30 = vld [vmem:[%s1 + $0x10] sm:$0xff]
  %v31 = vld [vmem:[%s1 + $0x18] sm:$0xff]
  %v32 = vld [vmem:[%s1 + $0x20] sm:$0xff]
  %v33 = vld [vmem:[%s1 + $0x28] sm:$0xff]
  %v34 = vld [vmem:[%s1 + $0x30] sm:$0xff]
  %v35 = vld [vmem:[%s1 + $0x38] sm:$0xff]
  %v36 = vld [vmem:[%s2] sm:$0xff]
  %v37 = vld [vmem:[%s2 + $0x8] sm:$0xff]
  %v38 = vld [vmem:[%s2 + $0x10] sm:$0xff]
  %v39 = vld [vmem:[%s2 + $0x18] sm:$0xff]
  %v40 = vld [vmem:[%s2 + $0x20] sm:$0xff]
  %v41 = vld [vmem:[%s2 + $0x28] sm:$0xff]
  %v42 = vld [vmem:[%s2 + $0x30] sm:$0xff]
  %v43 = vld [vmem:[%s2 + $0x38] sm:$0xff]
  %45 = vset.pattern.permute.xlu0 0
  %46 = vperm.xlu0 %45, %v36
  %v47 = vpop.permute.xlu0 %46
  %50 = vset.pattern.permute.xlu0 0
  %51 = vperm.xlu0 %50, %v37
  %v52 = vpop.permute.xlu0 %51
  %55 = vset.pattern.permute.xlu0 0
  %56 = vperm.xlu0 %55, %v38
  %v57 = vpop.permute.xlu0 %56
  %60 = vset.pattern.permute.xlu0 0
  %61 = vperm.xlu0 %60, %v39
  %v62 = vpop.permute.xlu0 %61
  %65 = vset.pattern.permute.xlu0 0
  %66 = vperm.xlu0 %65, %v40
  %v67 = vpop.permute.xlu0 %66
  %70 = vset.pattern.permute.xlu0 0
  %71 = vperm.xlu0 %70, %v41
  %v72 = vpop.permute.xlu0 %71
  %75 = vset.pattern.permute.xlu0 0
  %76 = vperm.xlu0 %75, %v42
  %v77 = vpop.permute.xlu0 %76
  %80 = vset.pattern.permute.xlu0 0
  %81 = vperm.xlu0 %80, %v43
  %v82 = vpop.permute.xlu0 %81
  %vm84 = vcmask 130048
  %v86 = vsel %vm84, %v28, 0
  %v89 = vsel %vm84, %v29, 0
  %v92 = vsel %vm84, %v30, 0
  %v95 = vsel %vm84, %v31, 0
  %v98 = vsel %vm84, %v32, 0
  %v101 = vsel %vm84, %v33, 0
  %v104 = vsel %vm84, %v34, 0
  %v107 = vsel %vm84, %v35, 0
  %109 = vmatprep.subr.mxu0 0.0
  %110 = vmatpush1.msra.mxu0 0.0
  %111 = vmatprep.subr.mxu0 0.0
  %112 = vmatpush1.msra.mxu0 0.0
  %113 = vmatprep.subr.mxu0 0.0
  %114 = vmatpush1.msra.mxu0 0.0
  %115 = vmatprep.subr.mxu0 0.0
  %116 = vmatpush1.msra.mxu0 0.0
  %117 = vmatprep.subr.mxu0 0.0
  %118 = vmatpush1.msra.mxu0 0.0
  %119 = vmatprep.subr.mxu0 0.0
  %120 = vmatpush1.msra.mxu0 0.0
  %121 = vmatprep.subr.mxu0 0.0
  %122 = vmatpush1.msra.mxu0 0.0
  %123 = vmatprep.subr.mxu0 0.0
  %124 = vmatpush1.msra.mxu0 0.0
  %125 = vmatprep.subr.mxu0 0.0
  %126 = vmatpush1.msra.mxu0 0.0
  %127 = vmatprep.subr.mxu0 0.0
  %128 = vmatpush1.msra.mxu0 0.0
  %129 = vmatprep.subr.mxu0 0.0
  %130 = vmatpush1.msra.mxu0 0.0
  %131 = vmatprep.subr.mxu0 0.0
  %132 = vmatpush1.msra.mxu0 0.0
  %133 = vmatprep.subr.mxu0 0.0
  %134 = vmatpush1.msra.mxu0 0.0
  %135 = vmatprep.subr.mxu0 0.0
  %136 = vmatpush1.msra.mxu0 0.0
  %137 = vmatprep.subr.mxu0 0.0
  %138 = vmatpush1.msra.mxu0 %v27
  %139 = vmatprep.subr.mxu0 0.0
  %140 = vmatpush1.msra.mxu0 %v26
  %141 = vmatprep.subr.mxu0 0.0
  %142 = vmatpush2.msra.mxu0 0.0
  %143 = vmatprep.subr.mxu0 0.0
  %144 = vmatpush2.msra.mxu0 0.0
  %145 = vmatprep.subr.mxu0 0.0
  %146 = vmatpush2.msra.mxu0 0.0
  %147 = vmatprep.subr.mxu0 0.0
  %148 = vmatpush2.msra.mxu0 0.0
  %149 = vmatprep.subr.mxu0 0.0
  %150 = vmatpush2.msra.mxu0 0.0
  %151 = vmatprep.subr.mxu0 0.0
  %152 = vmatpush2.msra.mxu0 0.0
  %153 = vmatprep.subr.mxu0 0.0
  %154 = vmatpush2.msra.mxu0 0.0
  %155 = vmatprep.subr.mxu0 0.0
  %156 = vmatpush2.msra.mxu0 0.0
  %157 = vmatprep.subr.mxu0 0.0
  %158 = vmatpush2.msra.mxu0 0.0
  %159 = vmatprep.subr.mxu0 0.0
  %160 = vmatpush2.msra.mxu0 0.0
  %161 = vmatprep.subr.mxu0 0.0
  %162 = vmatpush2.msra.mxu0 0.0
  %163 = vmatprep.subr.mxu0 0.0
  %164 = vmatpush2.msra.mxu0 0.0
  %165 = vmatprep.subr.mxu0 0.0
  %166 = vmatpush2.msra.mxu0 0.0
  %167 = vmatprep.subr.mxu0 0.0
  %168 = vmatpush2.msra.mxu0 0.0
  %169 = vmatprep.subr.mxu0 0.0
  %170 = vmatpush2.msra.mxu0 0.0
  %171 = vmatprep.subr.mxu0 0.0
  %172 = vmatpush2.msra.mxu0 0.0
  %173 = vmatprep.mubr.f32.mxu0 0.0
  %174 = vmatmul.mubr.f32.gmra.mxu0 %v86
  %v175 = vpop.f32.mrf.mxu0
  %v176 = vadd.f32 %v47, %v175
  %v177 = vpop.f32.mrf.mxu0
  %178 = vmatprep.mubr.f32.mxu0 0.0
  %179 = vmatmul.mubr.f32.gmra.mxu0 %v89
  %v180 = vpop.f32.mrf.mxu0
  %v181 = vadd.f32 %v52, %v180
  %v182 = vpop.f32.mrf.mxu0
  %183 = vmatprep.mubr.f32.mxu0 0.0
  %184 = vmatmul.mubr.f32.gmra.mxu0 %v92
  %v185 = vpop.f32.mrf.mxu0
  %v186 = vadd.f32 %v57, %v185
  %v187 = vpop.f32.mrf.mxu0
  %188 = vmatprep.mubr.f32.mxu0 0.0
  %189 = vmatmul.mubr.f32.gmra.mxu0 %v95
  %v190 = vpop.f32.mrf.mxu0
  %v191 = vadd.f32 %v62, %v190
  %v192 = vpop.f32.mrf.mxu0
  %193 = vmatprep.mubr.f32.mxu0 0.0
  %194 = vmatmul.mubr.f32.gmra.mxu0 %v98
  %v195 = vpop.f32.mrf.mxu0
  %v196 = vadd.f32 %v67, %v195
  %v197 = vpop.f32.mrf.mxu0
  %198 = vmatprep.mubr.f32.mxu0 0.0
  %199 = vmatmul.mubr.f32.gmra.mxu0 %v101
  %v200 = vpop.f32.mrf.mxu0
  %v201 = vadd.f32 %v72, %v200
  %v202 = vpop.f32.mrf.mxu0
  %203 = vmatprep.mubr.f32.mxu0 0.0
  %204 = vmatmul.mubr.f32.gmra.mxu0 %v104
  %v205 = vpop.f32.mrf.mxu0
  %v206 = vadd.f32 %v77, %v205
  %v207 = vpop.f32.mrf.mxu0
  %208 = vmatprep.mubr.f32.mxu0 0.0
  %209 = vmatmul.mubr.f32.gmra.mxu0 %v107
  %v210 = vpop.f32.mrf.mxu0
  %v211 = vadd.f32 %v82, %v210
  %v212 = vpop.f32.mrf.mxu0
  %213 = vdwg.mxu0
  %v214 = vmax.f32 %v176, 0.0
  %v215 = vmax.f32 %v181, 0.0
  %v216 = vmax.f32 %v186, 0.0
  %v217 = vmax.f32 %v191, 0.0
  %v218 = vmax.f32 %v196, 0.0
  %v219 = vmax.f32 %v201, 0.0
  %v220 = vmax.f32 %v206, 0.0
  %v221 = vmax.f32 %v211, 0.0
  %v222 = vld [vmem:[%s3] sm:$0xff]
  %v223 = vld [vmem:[%s3 + $0x8] sm:$0xff]
  %v224 = vld [vmem:[%s3 + $0x10] sm:$0xff]
  %v225 = vld [vmem:[%s3 + $0x18] sm:$0xff]
  %v226 = vld [vmem:[%s3 + $0x20] sm:$0xff]
  %v227 = vld [vmem:[%s3 + $0x28] sm:$0xff]
  %v228 = vld [vmem:[%s3 + $0x30] sm:$0xff]
  %v229 = vld [vmem:[%s3 + $0x38] sm:$0xff]
  %v230 = vld [vmem:[%s4] sm:$0xff]
  %v231 = vld [vmem:[%s4 + $0x8] sm:$0xff]
  %v232 = vld [vmem:[%s4 + $0x10] sm:$0xff]
  %v233 = vld [vmem:[%s4 + $0x18] sm:$0xff]
  %v234 = vld [vmem:[%s4 + $0x20] sm:$0xff]
  %v235 = vld [vmem:[%s4 + $0x28] sm:$0xff]
  %v236 = vld [vmem:[%s4 + $0x30] sm:$0xff]
  %v237 = vld [vmem:[%s4 + $0x38] sm:$0xff]
  %239 = vset.pattern.permute.xlu0 0
  %240 = vperm.xlu0 %239, %v230
  %v241 = vpop.permute.xlu0 %240
  %244 = vset.pattern.permute.xlu0 0
  %245 = vperm.xlu0 %244, %v231
  %v246 = vpop.permute.xlu0 %245
  %249 = vset.pattern.permute.xlu0 0
  %250 = vperm.xlu0 %249, %v232
  %v251 = vpop.permute.xlu0 %250
  %254 = vset.pattern.permute.xlu0 0
  %255 = vperm.xlu0 %254, %v233
  %v256 = vpop.permute.xlu0 %255
  %259 = vset.pattern.permute.xlu0 0
  %260 = vperm.xlu0 %259, %v234
  %v261 = vpop.permute.xlu0 %260
  %264 = vset.pattern.permute.xlu0 0
  %265 = vperm.xlu0 %264, %v235
  %v266 = vpop.permute.xlu0 %265
  %269 = vset.pattern.permute.xlu0 0
  %270 = vperm.xlu0 %269, %v236
  %v271 = vpop.permute.xlu0 %270
  %274 = vset.pattern.permute.xlu0 0
  %275 = vperm.xlu0 %274, %v237
  %v276 = vpop.permute.xlu0 %275
  %vm278 = vcmask 523264
  %v280 = vsel %vm278, %v222, 0
  %v283 = vsel %vm278, %v223, 0
  %v286 = vsel %vm278, %v224, 0
  %v289 = vsel %vm278, %v225, 0
  %v292 = vsel %vm278, %v226, 0
  %v295 = vsel %vm278, %v227, 0
  %v298 = vsel %vm278, %v228, 0
  %v301 = vsel %vm278, %v229, 0
  %303 = vmatprep.subr.mxu0 0.0
  %304 = vmatpush1.msra.mxu0 0.0
  %305 = vmatprep.subr.mxu0 0.0
  %306 = vmatpush1.msra.mxu0 0.0
  %307 = vmatprep.subr.mxu0 0.0
  %308 = vmatpush1.msra.mxu0 0.0
  %309 = vmatprep.subr.mxu0 0.0
  %310 = vmatpush1.msra.mxu0 0.0
  %311 = vmatprep.subr.mxu0 0.0
  %312 = vmatpush1.msra.mxu0 0.0
  %313 = vmatprep.subr.mxu0 0.0
  %314 = vmatpush1.msra.mxu0 0.0
  %315 = vmatprep.subr.mxu0 0.0
  %316 = vmatpush1.msra.mxu0 0.0
  %317 = vmatprep.subr.mxu0 0.0
  %318 = vmatpush1.msra.mxu0 0.0
  %319 = vmatprep.subr.mxu0 0.0
  %320 = vmatpush1.msra.mxu0 %v221
  %321 = vmatprep.subr.mxu0 0.0
  %322 = vmatpush1.msra.mxu0 %v220
  %323 = vmatprep.subr.mxu0 0.0
  %324 = vmatpush1.msra.mxu0 %v219
  %325 = vmatprep.subr.mxu0 0.0
  %326 = vmatpush1.msra.mxu0 %v218
  %327 = vmatprep.subr.mxu0 0.0
  %328 = vmatpush1.msra.mxu0 %v217
  %329 = vmatprep.subr.mxu0 0.0
  %330 = vmatpush1.msra.mxu0 %v216
  %331 = vmatprep.subr.mxu0 0.0
  %332 = vmatpush1.msra.mxu0 %v215
  %333 = vmatprep.subr.mxu0 0.0
  %334 = vmatpush1.msra.mxu0 %v214
  %335 = vmatprep.subr.mxu0 0.0
  %336 = vmatpush2.msra.mxu0 0.0
  %337 = vmatprep.subr.mxu0 0.0
  %338 = vmatpush2.msra.mxu0 0.0
  %339 = vmatprep.subr.mxu0 0.0
  %340 = vmatpush2.msra.mxu0 0.0
  %341 = vmatprep.subr.mxu0 0.0
  %342 = vmatpush2.msra.mxu0 0.0
  %343 = vmatprep.subr.mxu0 0.0
  %344 = vmatpush2.msra.mxu0 0.0
  %345 = vmatprep.subr.mxu0 0.0
  %346 = vmatpush2.msra.mxu0 0.0
  %347 = vmatprep.subr.mxu0 0.0
  %348 = vmatpush2.msra.mxu0 0.0
  %349 = vmatprep.subr.mxu0 0.0
  %350 = vmatpush2.msra.mxu0 0.0
  %351 = vmatprep.subr.mxu0 0.0
  %352 = vmatpush2.msra.mxu0 0.0
  %353 = vmatprep.subr.mxu0 0.0
  %354 = vmatpush2.msra.mxu0 0.0
  %355 = vmatprep.subr.mxu0 0.0
  %356 = vmatpush2.msra.mxu0 0.0
  %357 = vmatprep.subr.mxu0 0.0
  %358 = vmatpush2.msra.mxu0 0.0
  %359 = vmatprep.subr.mxu0 0.0
  %360 = vmatpush2.msra.mxu0 0.0
  %361 = vmatprep.subr.mxu0 0.0
  %362 = vmatpush2.msra.mxu0 0.0
  %363 = vmatprep.subr.mxu0 0.0
  %364 = vmatpush2.msra.mxu0 0.0
  %365 = vmatprep.subr.mxu0 0.0
  %366 = vmatpush2.msra.mxu0 0.0
  %367 = vmatprep.mubr.f32.mxu0 0.0
  %368 = vmatmul.mubr.f32.gmra.mxu0 %v280
  %v369 = vpop.f32.mrf.mxu0
  %v370 = vadd.f32 %v241, %v369
  %v371 = vpop.f32.mrf.mxu0
  %372 = vmatprep.mubr.f32.mxu0 0.0
  %373 = vmatmul.mubr.f32.gmra.mxu0 %v283
  %v374 = vpop.f32.mrf.mxu0
  %v375 = vadd.f32 %v246, %v374
  %v376 = vpop.f32.mrf.mxu0
  %377 = vmatprep.mubr.f32.mxu0 0.0
  %378 = vmatmul.mubr.f32.gmra.mxu0 %v286
  %v379 = vpop.f32.mrf.mxu0
  %v380 = vadd.f32 %v251, %v379
  %v381 = vpop.f32.mrf.mxu0
  %382 = vmatprep.mubr.f32.mxu0 0.0
  %383 = vmatmul.mubr.f32.gmra.mxu0 %v289
  %v384 = vpop.f32.mrf.mxu0
  %v385 = vadd.f32 %v256, %v384
  %v386 = vpop.f32.mrf.mxu0
  %387 = vmatprep.mubr.f32.mxu0 0.0
  %388 = vmatmul.mubr.f32.gmra.mxu0 %v292
  %v389 = vpop.f32.mrf.mxu0
  %v390 = vadd.f32 %v261, %v389
  %v391 = vpop.f32.mrf.mxu0
  %392 = vmatprep.mubr.f32.mxu0 0.0
  %393 = vmatmul.mubr.f32.gmra.mxu0 %v295
  %v394 = vpop.f32.mrf.mxu0
  %v395 = vadd.f32 %v266, %v394
  %v396 = vpop.f32.mrf.mxu0
  %397 = vmatprep.mubr.f32.mxu0 0.0
  %398 = vmatmul.mubr.f32.gmra.mxu0 %v298
  %v399 = vpop.f32.mrf.mxu0
  %v400 = vadd.f32 %v271, %v399
  %v401 = vpop.f32.mrf.mxu0
  %402 = vmatprep.mubr.f32.mxu0 0.0
  %403 = vmatmul.mubr.f32.gmra.mxu0 %v301
  %v404 = vpop.f32.mrf.mxu0
  %v405 = vadd.f32 %v276, %v404
  %v406 = vpop.f32.mrf.mxu0
  %407 = vdwg.mxu0
  %v408 = vmax.f32 %v370, 0.0
  %v409 = vmax.f32 %v375, 0.0
  %v410 = vmax.f32 %v380, 0.0
  %v411 = vmax.f32 %v385, 0.0
  %v412 = vmax.f32 %v390, 0.0
  %v413 = vmax.f32 %v395, 0.0
  %v414 = vmax.f32 %v400, 0.0
  %v415 = vmax.f32 %v405, 0.0
  %v416 = vld [vmem:[%s5] sm:$0xff]
  %v417 = vld [vmem:[%s6] sm:$0xff]
  %419 = vset.pattern.permute.xlu0 0
  %420 = vperm.xlu0 %419, %v417
  %v421 = vpop.permute.xlu0 %420
  %v424 = vsel %vm278, %v416, 0
  %426 = vmatprep.subr.mxu0 0.0
  %427 = vmatpush1.msra.mxu0 0.0
  %428 = vmatprep.subr.mxu0 0.0
  %429 = vmatpush1.msra.mxu0 0.0
  %430 = vmatprep.subr.mxu0 0.0
  %431 = vmatpush1.msra.mxu0 0.0
  %432 = vmatprep.subr.mxu0 0.0
  %433 = vmatpush1.msra.mxu0 0.0
  %434 = vmatprep.subr.mxu0 0.0
  %435 = vmatpush1.msra.mxu0 0.0
  %436 = vmatprep.subr.mxu0 0.0
  %437 = vmatpush1.msra.mxu0 0.0
  %438 = vmatprep.subr.mxu0 0.0
  %439 = vmatpush1.msra.mxu0 0.0
  %440 = vmatprep.subr.mxu0 0.0
  %441 = vmatpush1.msra.mxu0 0.0
  %442 = vmatprep.subr.mxu0 0.0
  %443 = vmatpush1.msra.mxu0 %v415
  %444 = vmatprep.subr.mxu0 0.0
  %445 = vmatpush1.msra.mxu0 %v414
  %446 = vmatprep.subr.mxu0 0.0
  %447 = vmatpush1.msra.mxu0 %v413
  %448 = vmatprep.subr.mxu0 0.0
  %449 = vmatpush1.msra.mxu0 %v412
  %450 = vmatprep.subr.mxu0 0.0
  %451 = vmatpush1.msra.mxu0 %v411
  %452 = vmatprep.subr.mxu0 0.0
  %453 = vmatpush1.msra.mxu0 %v410
  %454 = vmatprep.subr.mxu0 0.0
  %455 = vmatpush1.msra.mxu0 %v409
  %456 = vmatprep.subr.mxu0 0.0
  %457 = vmatpush1.msra.mxu0 %v408
  %458 = vmatprep.subr.mxu0 0.0
  %459 = vmatpush2.msra.mxu0 0.0
  %460 = vmatprep.subr.mxu0 0.0
  %461 = vmatpush2.msra.mxu0 0.0
  %462 = vmatprep.subr.mxu0 0.0
  %463 = vmatpush2.msra.mxu0 0.0
  %464 = vmatprep.subr.mxu0 0.0
  %465 = vmatpush2.msra.mxu0 0.0
  %466 = vmatprep.subr.mxu0 0.0
  %467 = vmatpush2.msra.mxu0 0.0
  %468 = vmatprep.subr.mxu0 0.0
  %469 = vmatpush2.msra.mxu0 0.0
  %470 = vmatprep.subr.mxu0 0.0
  %471 = vmatpush2.msra.mxu0 0.0
  %472 = vmatprep.subr.mxu0 0.0
  %473 = vmatpush2.msra.mxu0 0.0
  %474 = vmatprep.subr.mxu0 0.0
  %475 = vmatpush2.msra.mxu0 0.0
  %476 = vmatprep.subr.mxu0 0.0
  %477 = vmatpush2.msra.mxu0 0.0
  %478 = vmatprep.subr.mxu0 0.0
  %479 = vmatpush2.msra.mxu0 0.0
  %480 = vmatprep.subr.mxu0 0.0
  %481 = vmatpush2.msra.mxu0 0.0
  %482 = vmatprep.subr.mxu0 0.0
  %483 = vmatpush2.msra.mxu0 0.0
  %484 = vmatprep.subr.mxu0 0.0
  %485 = vmatpush2.msra.mxu0 0.0
  %486 = vmatprep.subr.mxu0 0.0
  %487 = vmatpush2.msra.mxu0 0.0
  %488 = vmatprep.subr.mxu0 0.0
  %489 = vmatpush2.msra.mxu0 0.0
  %490 = vmatprep.mubr.f32.mxu0 0.0
  %491 = vmatmul.mubr.f32.gmra.mxu0 %v424
  %v492 = vpop.f32.mrf.mxu0
  %v493 = vadd.f32 %v421, %v492
  %v494 = vpop.f32.mrf.mxu0
  %495 = vdwg.mxu0
  %vm496 = vcmask 15360
  %497 = vst.msk [vmem:[%s7] sm:$0xff] %vm496, %v493
  // Predicated region
  $region30: #{dq_network_forward.1} parent=0 // pred_check
    _
  $region31: #{dq_network_forward.1} parent=0 // pred_check_branch
    %499 = sbr.rel (0) target = $region33
  $region32: #{dq_network_forward.1} parent=0 // pred_region
    _
  $region33: #{dq_network_forward.1} parent=0 // pred_fallthru
    _
  // Predicated region
  $region34: #{dq_network_forward.1} parent=0 // pred_check
    _
  $region35: #{dq_network_forward.1} parent=0 // pred_check_branch
    %501 = sbr.rel (0) target = $region37
  $region36: #{dq_network_forward.1} parent=0 // pred_region
    _
  $region37: #{dq_network_forward.1} parent=0 // pred_fallthru
    _

</llo_original>
